<compile_context>
chip_gen: v7x
topology: tpu7x:2x2x1
jax: 0.10.0
libtpu: 0.0.40
codegen_flags: <defaults>
</compile_context>

<pallas_src>
import numpy as np
import jax
import jax.numpy as jnp
from jax.experimental import pallas as pl
from jax.experimental.pallas import tpu as pltpu

# ------------------------- synthetic FLAME sizes -------------------------
B = 2                    # batch
V = 256                  # vertices (real FLAME: 5023) -- small synthetic mesh
NJ = 5                   # joints: global, neck, jaw, eye_l, eye_r
N_SHAPE, N_EXP = 8, 4
N_BETAS = N_SHAPE + N_EXP
N_POSE = (NJ - 1) * 9    # pose-blendshape basis size = 36
K_AUG = N_BETAS + N_POSE + 1   # 49: [shapedirs ; posedirs ; template-row]
N_FACES = 500
N_STATIC = 51            # static landmarks
N_DYN = 17               # dynamic contour landmarks
N_BINS = 79              # dynamic contour angle bins
N_FULL = 68              # full 68 landmarks
PARENTS = [-1, 0, 1, 1, 1]
NECK_KIN_CHAIN = [1, 0]
V3 = V * 3
F32 = jnp.float32
BF16 = jnp.bfloat16

# Tile over V: half of V (even, >=2 "parallel" steps for v7x), multiple of 128.
# At real FLAME sizes pick the largest even split (~2048-2560 lanes) -- VMEM is not
# the binding constraint on any generation; per-step overhead is.
TILE_V = max(128, (V // 2) // 128 * 128)
assert V % TILE_V == 0 and (V // TILE_V) % 2 == 0


# ============================ fused Pallas kernel ============================
def _lbs_fused_kernel(bf_ref, dirs_ref, at_ref, wt_ref, o_ref):
    # ---- blend: v_posed[c] = [betas | pose_feat | 1] @ [shapedirs ; posedirs ; tmpl]
    dx = dirs_ref[0]                                     # (K_AUG, tileV) x-coord slab
    dy = dirs_ref[1]
    dz = dirs_ref[2]
    bf = bf_ref[...].astype(dx.dtype)                    # bf16 dirs -> native bf16 MXU
    vpx = jnp.dot(bf, dx, preferred_element_type=jnp.float32)   # (B, tileV)
    vpy = jnp.dot(bf, dy, preferred_element_type=jnp.float32)
    vpz = jnp.dot(bf, dz, preferred_element_type=jnp.float32)

    # ---- skinning: TT[r] = sum_j A[b,r,j] * W^T[j]  (K=NJ=5 -> VPU broadcast-FMAs,
    # keeps the MXU free for the dirs stream above)
    wt = wt_ref[...]                                     # (NJ, tileV)
    at = at_ref[...]                                     # (B, 12, NJ)
    nb, _, nj = at.shape
    for b in range(nb):                                  # static unroll (tiny B)
        ab = at[b]                                       # (12, NJ)
        tt = ab[:, 0:1] * wt[0:1, :]
        for j in range(1, nj):
            tt = tt + ab[:, j:j + 1] * wt[j:j + 1, :]    # (12, tileV)
        vx = vpx[b:b + 1, :]
        vy = vpy[b:b + 1, :]
        vz = vpz[b:b + 1, :]
        # direct per-row stores (no sublane concat/stack)
        o_ref[b, 0:1, :] = tt[0:1] * vx + tt[1:2] * vy + tt[2:3] * vz + tt[3:4]
        o_ref[b, 1:2, :] = tt[4:5] * vx + tt[5:6] * vy + tt[6:7] * vz + tt[7:8]
        o_ref[b, 2:3, :] = tt[8:9] * vx + tt[9:10] * vy + tt[10:11] * vz + tt[11:12]


def lbs_fused_pallas(bf_aug, dirs_aug, AT, WT):
    Bn, K = bf_aug.shape
    NJl, Vn = WT.shape
    n_tiles = Vn // TILE_V
    return pl.pallas_call(
        _lbs_fused_kernel,
        out_shape=jax.ShapeDtypeStruct((Bn, 3, Vn), F32),
        grid=(n_tiles,),
        in_specs=[
            pl.BlockSpec((Bn, K), lambda t: (0, 0)),              # tiny, resident
            pl.BlockSpec((3, K, TILE_V), lambda t: (0, 0, t)),    # streamed dirs tile
            pl.BlockSpec((Bn, 12, NJl), lambda t: (0, 0, 0)),     # tiny, resident
            pl.BlockSpec((NJl, TILE_V), lambda t: (0, t)),        # streamed lbs weights^T
        ],
        out_specs=pl.BlockSpec((Bn, 3, TILE_V), lambda t: (0, 0, t)),
        compiler_params=pltpu.CompilerParams(dimension_semantics=("parallel",)),
    )(bf_aug, dirs_aug, AT, WT)


# ============================== JAX glue ==============================
def batch_rodrigues(rot_vecs):
    angle = jnp.linalg.norm(rot_vecs + 1e-8, axis=1, keepdims=True)     # (N,1)
    rot_dir = rot_vecs / angle
    cos = jnp.cos(angle)[:, None, :]                                    # (N,1,1)
    sin = jnp.sin(angle)[:, None, :]
    rx, ry, rz = jnp.split(rot_dir, 3, axis=1)
    zeros = jnp.zeros_like(rx)
    K = jnp.concatenate([zeros, -rz, ry, rz, zeros, -rx, -ry, rx, zeros],
                        axis=1).reshape(-1, 3, 3)
    ident = jnp.eye(3, dtype=rot_vecs.dtype)[None]
    return ident + sin * K + (1.0 - cos) * jnp.matmul(K, K)


def rot_mat_to_euler(rot_mats):
    sy = jnp.sqrt(rot_mats[:, 0, 0] ** 2 + rot_mats[:, 1, 0] ** 2)
    return jnp.arctan2(-rot_mats[:, 2, 0], sy)


def batch_rigid_transform(rot_mats, joints):
    Bn = joints.shape[0]
    parent_idx = jnp.array(PARENTS[1:], dtype=jnp.int32)
    rel_joints = jnp.concatenate(
        [joints[:, :1], joints[:, 1:] - joints[:, parent_idx]], axis=1)  # (B,J,3)
    top = jnp.concatenate([rot_mats, rel_joints[..., None]], axis=-1)    # (B,J,3,4)
    bottom = jnp.broadcast_to(jnp.array([0., 0., 0., 1.], dtype=F32), (Bn, NJ, 1, 4))
    tmats = jnp.concatenate([top, bottom], axis=2)                       # (B,J,4,4)
    chain = [tmats[:, 0]]
    for i in range(1, NJ):
        chain.append(jnp.matmul(chain[PARENTS[i]], tmats[:, i]))
    transforms = jnp.stack(chain, axis=1)
    posed_joints = transforms[:, :, :3, 3]
    joints_hom = jnp.concatenate([joints[..., None], jnp.zeros((Bn, NJ, 1, 1), F32)],
                                 axis=2)
    tj = jnp.matmul(transforms, joints_hom)                              # (B,J,4,1)
    rel_transforms = transforms - jnp.pad(tj, ((0, 0), (0, 0), (0, 0), (3, 0)))
    return posed_joints, rel_transforms


def lbs(betas, pose, v_template, shapedirs, posedirs, J_regressor,
        lbs_weights, use_pallas=True, dirs_dtype=F32):
    Bn = betas.shape[0]
    rot_mats = batch_rodrigues(pose.reshape(-1, 3)).reshape(Bn, NJ, 3, 3)
    ident = jnp.eye(3, dtype=F32)
    pose_feature = (rot_mats[:, 1:] - ident).reshape(Bn, N_POSE)

    if use_pallas:
        # ---- model-constant layout prep (cached once in production) ----
        # coordinate-major dirs with the template folded in as the last row (K=48+1)
        S_planar = jnp.transpose(shapedirs, (1, 2, 0))                     # (3, L, V)
        P_planar = posedirs.reshape(N_POSE, V, 3).transpose(2, 0, 1)       # (3, P, V)
        T_planar = v_template.T[:, None, :]                                # (3, 1, V)
        dirs_aug = jnp.concatenate([S_planar, P_planar, T_planar], axis=1)  # (3, 49, V)
        dirs_aug = dirs_aug.astype(dirs_dtype)  # bf16 halves the dominant HBM stream
        ones = jnp.ones((Bn, 1), F32)
        bf_aug = jnp.concatenate([betas, pose_feature, ones], axis=1)      # (B, 49)

        # Joint regression from v_shaped, algebraically folded through model constants:
        # no v_shaped HBM writeback / re-read anywhere.
        JR_tmpl = J_regressor @ v_template                                 # (NJ, 3)
        JR_shape = jnp.einsum('jv,vkl->jkl', J_regressor, shapedirs)       # (NJ,3,L)
        J = JR_tmpl[None] + jnp.einsum('bl,jkl->bjk', betas, JR_shape)     # (B,NJ,3)

        J_transformed, A = batch_rigid_transform(rot_mats, J)
        # only rows 0..2 of each 4x4 are used (row 3 = [0,0,0,1] is never read)
        AT = A[:, :, :3, :].reshape(Bn, NJ, 12).transpose(0, 2, 1)         # (B,12,NJ)
        WT = lbs_weights.T                                                 # (NJ, V)

        verts_planar = lbs_fused_pallas(bf_aug, dirs_aug, AT, WT)          # (B,3,V)
        verts = jnp.transpose(verts_planar, (0, 2, 1))                     # (B,V,3)
        return verts, J_transformed

    # -------- pure-JAX reference path (faithful to the PyTorch module) --------
    S2d = shapedirs.reshape(V3, N_BETAS).T                               # (L, V*3)
    tmpl_flat = v_template.reshape(1, V3)
    v_shaped_flat = tmpl_flat + betas @ S2d
    v_posed_flat = v_shaped_flat + pose_feature @ posedirs
    v_shaped = v_shaped_flat.reshape(Bn, V, 3)
    v_posed = v_posed_flat.reshape(Bn, V, 3)

    J = jnp.einsum('bvk,jv->bjk', v_shaped, J_regressor)                 # (B,5,3)
    J_transformed, A = batch_rigid_transform(rot_mats, J)
    A_flat = A.reshape(Bn, NJ, 16)
    T = jnp.einsum('vj,bjk->bvk', lbs_weights, A_flat).reshape(Bn, V, 4, 4)
    v_homo = jnp.concatenate([v_posed, jnp.ones((Bn, V, 1), F32)], axis=2)
    verts = jnp.matmul(T, v_homo[..., None])[:, :, :3, 0]
    return verts, J_transformed


def vertices2landmarks(vertices, faces, lmk_faces_idx, lmk_bary):
    # Plain-JAX gather + barycentric weighted sum (tiny; XLA fuses this fine).
    Bn = vertices.shape[0]
    lmk_faces = faces[lmk_faces_idx]                                     # (B,L,3)
    lmk_vertices = vertices[jnp.arange(Bn)[:, None, None], lmk_faces]    # (B,L,3,3)
    return jnp.einsum('blfi,blf->bli', lmk_vertices, lmk_bary)


def find_dynamic_lmk(full_pose, params):
    Bn = full_pose.shape[0]
    chain = jnp.array(NECK_KIN_CHAIN, dtype=jnp.int32)
    aa = full_pose.reshape(Bn, -1, 3)[:, chain]                          # (B,2,3)
    rot = batch_rodrigues(aa.reshape(-1, 3)).reshape(Bn, -1, 3, 3)
    rel = jnp.broadcast_to(jnp.eye(3, dtype=F32)[None], (Bn, 3, 3))
    for idx in range(len(NECK_KIN_CHAIN)):
        rel = jnp.matmul(rot[:, idx], rel)
    y = jnp.round(jnp.minimum(rot_mat_to_euler(rel) * 180.0 / np.pi, 39.0))
    y = y.astype(jnp.int32)
    neg_mask = (y < 0).astype(jnp.int32)
    mask = (y < -39).astype(jnp.int32)
    neg_vals = mask * 78 + (1 - mask) * (39 - y)
    y = neg_mask * neg_vals + (1 - neg_mask) * y
    return params['dynamic_lmk_faces_idx'][y], params['dynamic_lmk_bary_coords'][y]


def flame_forward(params, shape_params, expression_params, pose_params,
                  eye_pose_params, use_pallas=True, dirs_dtype=F32):
    Bn = shape_params.shape[0]
    betas = jnp.concatenate([shape_params, expression_params], axis=1)
    neck_pose = jnp.broadcast_to(params['neck_pose'], (Bn, 3))
    full_pose = jnp.concatenate(
        [pose_params[:, :3], neck_pose, pose_params[:, 3:], eye_pose_params], axis=1)

    vertices, _ = lbs(betas, full_pose, params['v_template'], params['shapedirs'],
                      params['posedirs'], params['J_regressor'],
                      params['lbs_weights'], use_pallas, dirs_dtype)

    # merge both landmark sets into a single gather + weighted sum
    lmk_faces_idx = jnp.broadcast_to(params['lmk_faces_idx'][None], (Bn, N_STATIC))
    lmk_bary = jnp.broadcast_to(params['lmk_bary_coords'][None], (Bn, N_STATIC, 3))
    dyn_idx, dyn_bary = find_dynamic_lmk(full_pose, params)
    full_idx = jnp.tile(params['full_lmk_faces_idx'], (Bn, 1))
    full_bary = jnp.tile(params['full_lmk_bary_coords'], (Bn, 1, 1))

    all_idx = jnp.concatenate([dyn_idx, lmk_faces_idx, full_idx], axis=1)
    all_bary = jnp.concatenate([dyn_bary, lmk_bary, full_bary], axis=1)
    all_lmk = vertices2landmarks(vertices, params['faces'], all_idx, all_bary)

    n2d = N_DYN + N_STATIC
    landmarks2d = all_lmk[:, :n2d]
    landmarks3d = all_lmk[:, n2d:]
    return vertices, landmarks2d, landmarks3d


# ======================= deterministic synthetic init =======================
def init_params(key):
    ks = jax.random.split(key, 12)
    v_template = jax.random.normal(ks[0], (V, 3), F32) * 0.1
    shapedirs = jax.random.normal(ks[1], (V, 3, N_BETAS), F32) * 0.01
    posedirs = jax.random.normal(ks[2], (N_POSE, V3), F32) * 0.01
    jr = jax.random.uniform(ks[3], (NJ, V), F32)
    J_regressor = jr / jnp.sum(jr, axis=1, keepdims=True)
    lw = jax.random.uniform(ks[4], (V, NJ), F32)
    lbs_weights = lw / jnp.sum(lw, axis=1, keepdims=True)
    faces = jax.random.randint(ks[5], (N_FACES, 3), 0, V, dtype=jnp.int32)
    lmk_faces_idx = jax.random.randint(ks[6], (N_STATIC,), 0, N_FACES, dtype=jnp.int32)
    b1 = jax.random.uniform(ks[7], (N_STATIC, 3), F32) + 0.1
    dyn_faces = jax.random.randint(ks[8], (N_BINS, N_DYN), 0, N_FACES, dtype=jnp.int32)
    b2 = jax.random.uniform(ks[9], (N_BINS, N_DYN, 3), F32) + 0.1
    full_faces = jax.random.randint(ks[10], (1, N_FULL), 0, N_FACES, dtype=jnp.int32)
    b3 = jax.random.uniform(ks[11], (1, N_FULL, 3), F32) + 0.1
    return dict(
        v_template=v_template,
        shapedirs=shapedirs,
        posedirs=posedirs,
        J_regressor=J_regressor,
        lbs_weights=lbs_weights,
        faces=faces,
        lmk_faces_idx=lmk_faces_idx,
        lmk_bary_coords=b1 / jnp.sum(b1, axis=-1, keepdims=True),
        dynamic_lmk_faces_idx=dyn_faces,
        dynamic_lmk_bary_coords=b2 / jnp.sum(b2, axis=-1, keepdims=True),
        full_lmk_faces_idx=full_faces,
        full_lmk_bary_coords=b3 / jnp.sum(b3, axis=-1, keepdims=True),
        neck_pose=jnp.zeros((1, 3), F32),
        eye_pose=jnp.zeros((1, 6), F32),
    )


if __name__ == "__main__":
    key = jax.random.PRNGKey(0)
    pkey, ikey = jax.random.split(key)
    params = init_params(pkey)

    k1, k2, k3, k4 = jax.random.split(ikey, 4)
    shape_params = jax.random.normal(k1, (B, N_SHAPE), F32) * 0.5
    expression_params = jax.random.normal(k2, (B, N_EXP), F32) * 0.5
    pose_params = jax.random.normal(k3, (B, 6), F32) * 0.2
    eye_pose_params = jax.random.normal(k4, (B, 6), F32) * 0.1

    # fused Pallas path, f32 dirs
    verts, lmk2d, lmk3d = jax.block_until_ready(
        flame_forward(params, shape_params, expression_params,
                      pose_params, eye_pose_params, use_pallas=True, dirs_dtype=F32))

    # pure-JAX reference of the same forward for correctness
    verts_r, lmk2d_r, lmk3d_r = jax.block_until_ready(
        flame_forward(params, shape_params, expression_params,
                      pose_params, eye_pose_params, use_pallas=False))

    assert verts.shape == (B, V, 3)
    assert lmk2d.shape == (B, N_DYN + N_STATIC, 3)
    assert lmk3d.shape == (B, N_FULL, 3)
    np.testing.assert_allclose(np.asarray(verts), np.asarray(verts_r),
                               rtol=1e-4, atol=3e-5)
    np.testing.assert_allclose(np.asarray(lmk2d), np.asarray(lmk2d_r),
                               rtol=1e-4, atol=3e-5)
    np.testing.assert_allclose(np.asarray(lmk3d), np.asarray(lmk3d_r),
                               rtol=1e-4, atol=3e-5)

    # bf16-dirs path: halves the dominant HBM stream; f32 MXU accumulation.
    # Looser tolerances expected (dirs/template quantized to bf16).
    verts_h, lmk2d_h, lmk3d_h = jax.block_until_ready(
        flame_forward(params, shape_params, expression_params,
                      pose_params, eye_pose_params, use_pallas=True, dirs_dtype=BF16))
    np.testing.assert_allclose(np.asarray(verts_h), np.asarray(verts_r),
                               rtol=2e-2, atol=5e-3)
    np.testing.assert_allclose(np.asarray(lmk2d_h), np.asarray(lmk2d_r),
                               rtol=2e-2, atol=5e-3)
    np.testing.assert_allclose(np.asarray(lmk3d_h), np.asarray(lmk3d_r),
                               rtol=2e-2, atol=5e-3)

    print("KERNEL_OK")
</pallas_src>

<mosaic_0001>
module attributes {stable_mosaic.version = 11 : i64} {
  func.func @_lbs_fused_kernel(%arg0: i32, %arg1: memref<2x49xf32, #tpu.memory_space<vmem>>, %arg2: memref<3x49x128xf32, #tpu.memory_space<vmem>>, %arg3: memref<2x12x5xf32, #tpu.memory_space<vmem>>, %arg4: memref<5x128xf32, #tpu.memory_space<vmem>>, %arg5: memref<2x3x128xf32, #tpu.memory_space<vmem>>) attributes {dimension_semantics = [#tpu.dimension_semantics<parallel>], iteration_bounds = array<i64: 2>, scalar_prefetch = 0 : i64, scratch_operands = 0 : i64, tpu.core_type = #tpu.core_type<tc>, window_params = [{pipeline_mode = #tpu.pipeline_mode<synchronous>, transform_indices = @transform_0, window_bounds = array<i64: 2, 49>}, {transform_indices = @transform_1, window_bounds = array<i64: 3, 49, 128>}, {pipeline_mode = #tpu.pipeline_mode<synchronous>, transform_indices = @transform_2, window_bounds = array<i64: 2, 12, 5>}, {transform_indices = @transform_3, window_bounds = array<i64: 5, 128>}, {transform_indices = @transform_4, window_bounds = array<i64: 2, 3, 128>}]} {
    %c0 = arith.constant 0 : index
    %c0_0 = arith.constant 0 : index
    %c0_1 = arith.constant 0 : index
    %0 = vector.load %arg2[%c0, %c0_0, %c0_1] : memref<3x49x128xf32, #tpu.memory_space<vmem>>, vector<1x49x128xf32>
    %1 = vector.shape_cast %0 : vector<1x49x128xf32> to vector<49x128xf32>
    %c1 = arith.constant 1 : index
    %c0_2 = arith.constant 0 : index
    %c0_3 = arith.constant 0 : index
    %2 = vector.load %arg2[%c1, %c0_2, %c0_3] : memref<3x49x128xf32, #tpu.memory_space<vmem>>, vector<1x49x128xf32>
    %3 = vector.shape_cast %2 : vector<1x49x128xf32> to vector<49x128xf32>
    %c2 = arith.constant 2 : index
    %c0_4 = arith.constant 0 : index
    %c0_5 = arith.constant 0 : index
    %4 = vector.load %arg2[%c2, %c0_4, %c0_5] : memref<3x49x128xf32, #tpu.memory_space<vmem>>, vector<1x49x128xf32>
    %5 = vector.shape_cast %4 : vector<1x49x128xf32> to vector<49x128xf32>
    %c0_6 = arith.constant 0 : index
    %c0_7 = arith.constant 0 : index
    %6 = vector.load %arg1[%c0_6, %c0_7] : memref<2x49xf32, #tpu.memory_space<vmem>>, vector<2x49xf32>
    %cst = arith.constant dense<0.000000e+00> : vector<2x128xf32>
    %7 = tpu.matmul %6, %1, %cst {dimension_numbers = #tpu.dot_dimension_numbers<[1], [0], [0], [1], [0, 0, 1, 1], [], []>} : vector<2x49xf32>, vector<49x128xf32>, vector<2x128xf32> -> vector<2x128xf32>
    %cst_8 = arith.constant dense<0.000000e+00> : vector<2x128xf32>
    %8 = tpu.matmul %6, %3, %cst_8 {dimension_numbers = #tpu.dot_dimension_numbers<[1], [0], [0], [1], [0, 0, 1, 1], [], []>} : vector<2x49xf32>, vector<49x128xf32>, vector<2x128xf32> -> vector<2x128xf32>
    %cst_9 = arith.constant dense<0.000000e+00> : vector<2x128xf32>
    %9 = tpu.matmul %6, %5, %cst_9 {dimension_numbers = #tpu.dot_dimension_numbers<[1], [0], [0], [1], [0, 0, 1, 1], [], []>} : vector<2x49xf32>, vector<49x128xf32>, vector<2x128xf32> -> vector<2x128xf32>
    %c0_10 = arith.constant 0 : index
    %c0_11 = arith.constant 0 : index
    %10 = vector.load %arg4[%c0_10, %c0_11] : memref<5x128xf32, #tpu.memory_space<vmem>>, vector<5x128xf32>
    %c0_12 = arith.constant 0 : index
    %c0_13 = arith.constant 0 : index
    %c0_14 = arith.constant 0 : index
    %11 = vector.load %arg3[%c0_12, %c0_13, %c0_14] : memref<2x12x5xf32, #tpu.memory_space<vmem>>, vector<2x12x5xf32>
    %12 = vector.extract_strided_slice %11 {offsets = [0, 0, 0], sizes = [1, 12, 5], strides = [1, 1, 1]} : vector<2x12x5xf32> to vector<1x12x5xf32>
    %13 = vector.shape_cast %12 : vector<1x12x5xf32> to vector<12x5xf32>
    %14 = vector.extract_strided_slice %13 {offsets = [0, 0], sizes = [12, 1], strides = [1, 1]} : vector<12x5xf32> to vector<12x1xf32>
    %15 = vector.extract_strided_slice %10 {offsets = [0, 0], sizes = [1, 128], strides = [1, 1]} : vector<5x128xf32> to vector<1x128xf32>
    %16 = vector.broadcast %14 : vector<12x1xf32> to vector<12x128xf32>
    %17 = vector.broadcast %15 : vector<1x128xf32> to vector<12x128xf32>
    %18 = arith.mulf %16, %17 : vector<12x128xf32>
    %19 = vector.extract_strided_slice %13 {offsets = [0, 1], sizes = [12, 1], strides = [1, 1]} : vector<12x5xf32> to vector<12x1xf32>
    %20 = vector.extract_strided_slice %10 {offsets = [1, 0], sizes = [1, 128], strides = [1, 1]} : vector<5x128xf32> to vector<1x128xf32>
    %21 = vector.broadcast %19 : vector<12x1xf32> to vector<12x128xf32>
    %22 = vector.broadcast %20 : vector<1x128xf32> to vector<12x128xf32>
    %23 = arith.mulf %21, %22 : vector<12x128xf32>
    %24 = arith.addf %18, %23 : vector<12x128xf32>
    %25 = vector.extract_strided_slice %13 {offsets = [0, 2], sizes = [12, 1], strides = [1, 1]} : vector<12x5xf32> to vector<12x1xf32>
    %26 = vector.extract_strided_slice %10 {offsets = [2, 0], sizes = [1, 128], strides = [1, 1]} : vector<5x128xf32> to vector<1x128xf32>
    %27 = vector.broadcast %25 : vector<12x1xf32> to vector<12x128xf32>
    %28 = vector.broadcast %26 : vector<1x128xf32> to vector<12x128xf32>
    %29 = arith.mulf %27, %28 : vector<12x128xf32>
    %30 = arith.addf %24, %29 : vector<12x128xf32>
    %31 = vector.extract_strided_slice %13 {offsets = [0, 3], sizes = [12, 1], strides = [1, 1]} : vector<12x5xf32> to vector<12x1xf32>
    %32 = vector.extract_strided_slice %10 {offsets = [3, 0], sizes = [1, 128], strides = [1, 1]} : vector<5x128xf32> to vector<1x128xf32>
    %33 = vector.broadcast %31 : vector<12x1xf32> to vector<12x128xf32>
    %34 = vector.broadcast %32 : vector<1x128xf32> to vector<12x128xf32>
    %35 = arith.mulf %33, %34 : vector<12x128xf32>
    %36 = arith.addf %30, %35 : vector<12x128xf32>
    %37 = vector.extract_strided_slice %13 {offsets = [0, 4], sizes = [12, 1], strides = [1, 1]} : vector<12x5xf32> to vector<12x1xf32>
    %38 = vector.extract_strided_slice %10 {offsets = [4, 0], sizes = [1, 128], strides = [1, 1]} : vector<5x128xf32> to vector<1x128xf32>
    %39 = vector.broadcast %37 : vector<12x1xf32> to vector<12x128xf32>
    %40 = vector.broadcast %38 : vector<1x128xf32> to vector<12x128xf32>
    %41 = arith.mulf %39, %40 : vector<12x128xf32>
    %42 = arith.addf %36, %41 : vector<12x128xf32>
    %43 = vector.extract_strided_slice %7 {offsets = [0, 0], sizes = [1, 128], strides = [1, 1]} : vector<2x128xf32> to vector<1x128xf32>
    %44 = vector.extract_strided_slice %8 {offsets = [0, 0], sizes = [1, 128], strides = [1, 1]} : vector<2x128xf32> to vector<1x128xf32>
    %45 = vector.extract_strided_slice %9 {offsets = [0, 0], sizes = [1, 128], strides = [1, 1]} : vector<2x128xf32> to vector<1x128xf32>
    %46 = vector.extract_strided_slice %42 {offsets = [0, 0], sizes = [1, 128], strides = [1, 1]} : vector<12x128xf32> to vector<1x128xf32>
    %47 = arith.mulf %46, %43 : vector<1x128xf32>
    %48 = vector.extract_strided_slice %42 {offsets = [1, 0], sizes = [1, 128], strides = [1, 1]} : vector<12x128xf32> to vector<1x128xf32>
    %49 = arith.mulf %48, %44 : vector<1x128xf32>
    %50 = arith.addf %47, %49 : vector<1x128xf32>
    %51 = vector.extract_strided_slice %42 {offsets = [2, 0], sizes = [1, 128], strides = [1, 1]} : vector<12x128xf32> to vector<1x128xf32>
    %52 = arith.mulf %51, %45 : vector<1x128xf32>
    %53 = arith.addf %50, %52 : vector<1x128xf32>
    %54 = vector.extract_strided_slice %42 {offsets = [3, 0], sizes = [1, 128], strides = [1, 1]} : vector<12x128xf32> to vector<1x128xf32>
    %55 = arith.addf %53, %54 : vector<1x128xf32>
    %c0_15 = arith.constant 0 : index
    %c0_16 = arith.constant 0 : index
    %c0_17 = arith.constant 0 : index
    %56 = vector.load %arg5[%c0_15, %c0_16, %c0_17] : memref<2x3x128xf32, #tpu.memory_space<vmem>>, vector<1x1x128xf32>
    %57 = vector.shape_cast %56 : vector<1x1x128xf32> to vector<1x128xf32>
    %58 = vector.shape_cast %55 : vector<1x128xf32> to vector<1x1x128xf32>
    tpu.vector_store %arg5[%c0_15, %c0_16, %c0_17], %58 {strides = array<i32>} : memref<2x3x128xf32, #tpu.memory_space<vmem>>, vector<1x1x128xf32>,
    %59 = vector.extract_strided_slice %42 {offsets = [4, 0], sizes = [1, 128], strides = [1, 1]} : vector<12x128xf32> to vector<1x128xf32>
    %60 = arith.mulf %59, %43 : vector<1x128xf32>
    %61 = vector.extract_strided_slice %42 {offsets = [5, 0], sizes = [1, 128], strides = [1, 1]} : vector<12x128xf32> to vector<1x128xf32>
    %62 = arith.mulf %61, %44 : vector<1x128xf32>
    %63 = arith.addf %60, %62 : vector<1x128xf32>
    %64 = vector.extract_strided_slice %42 {offsets = [6, 0], sizes = [1, 128], strides = [1, 1]} : vector<12x128xf32> to vector<1x128xf32>
    %65 = arith.mulf %64, %45 : vector<1x128xf32>
    %66 = arith.addf %63, %65 : vector<1x128xf32>
    %67 = vector.extract_strided_slice %42 {offsets = [7, 0], sizes = [1, 128], strides = [1, 1]} : vector<12x128xf32> to vector<1x128xf32>
    %68 = arith.addf %66, %67 : vector<1x128xf32>
    %c0_18 = arith.constant 0 : index
    %c1_19 = arith.constant 1 : index
    %c0_20 = arith.constant 0 : index
    %69 = vector.load %arg5[%c0_18, %c1_19, %c0_20] : memref<2x3x128xf32, #tpu.memory_space<vmem>>, vector<1x1x128xf32>
    %70 = vector.shape_cast %69 : vector<1x1x128xf32> to vector<1x128xf32>
    %71 = vector.shape_cast %68 : vector<1x128xf32> to vector<1x1x128xf32>
    tpu.vector_store %arg5[%c0_18, %c1_19, %c0_20], %71 {strides = array<i32>} : memref<2x3x128xf32, #tpu.memory_space<vmem>>, vector<1x1x128xf32>,
    %72 = vector.extract_strided_slice %42 {offsets = [8, 0], sizes = [1, 128], strides = [1, 1]} : vector<12x128xf32> to vector<1x128xf32>
    %73 = arith.mulf %72, %43 : vector<1x128xf32>
    %74 = vector.extract_strided_slice %42 {offsets = [9, 0], sizes = [1, 128], strides = [1, 1]} : vector<12x128xf32> to vector<1x128xf32>
    %75 = arith.mulf %74, %44 : vector<1x128xf32>
    %76 = arith.addf %73, %75 : vector<1x128xf32>
    %77 = vector.extract_strided_slice %42 {offsets = [10, 0], sizes = [1, 128], strides = [1, 1]} : vector<12x128xf32> to vector<1x128xf32>
    %78 = arith.mulf %77, %45 : vector<1x128xf32>
    %79 = arith.addf %76, %78 : vector<1x128xf32>
    %80 = vector.extract_strided_slice %42 {offsets = [11, 0], sizes = [1, 128], strides = [1, 1]} : vector<12x128xf32> to vector<1x128xf32>
    %81 = arith.addf %79, %80 : vector<1x128xf32>
    %c0_21 = arith.constant 0 : index
    %c2_22 = arith.constant 2 : index
    %c0_23 = arith.constant 0 : index
    %82 = vector.load %arg5[%c0_21, %c2_22, %c0_23] : memref<2x3x128xf32, #tpu.memory_space<vmem>>, vector<1x1x128xf32>
    %83 = vector.shape_cast %82 : vector<1x1x128xf32> to vector<1x128xf32>
    %84 = vector.shape_cast %81 : vector<1x128xf32> to vector<1x1x128xf32>
    tpu.vector_store %arg5[%c0_21, %c2_22, %c0_23], %84 {strides = array<i32>} : memref<2x3x128xf32, #tpu.memory_space<vmem>>, vector<1x1x128xf32>,
    %85 = vector.extract_strided_slice %11 {offsets = [1, 0, 0], sizes = [1, 12, 5], strides = [1, 1, 1]} : vector<2x12x5xf32> to vector<1x12x5xf32>
    %86 = vector.shape_cast %85 : vector<1x12x5xf32> to vector<12x5xf32>
    %87 = vector.extract_strided_slice %86 {offsets = [0, 0], sizes = [12, 1], strides = [1, 1]} : vector<12x5xf32> to vector<12x1xf32>
    %88 = vector.extract_strided_slice %10 {offsets = [0, 0], sizes = [1, 128], strides = [1, 1]} : vector<5x128xf32> to vector<1x128xf32>
    %89 = vector.broadcast %87 : vector<12x1xf32> to vector<12x128xf32>
    %90 = vector.broadcast %88 : vector<1x128xf32> to vector<12x128xf32>
    %91 = arith.mulf %89, %90 : vector<12x128xf32>
    %92 = vector.extract_strided_slice %86 {offsets = [0, 1], sizes = [12, 1], strides = [1, 1]} : vector<12x5xf32> to vector<12x1xf32>
    %93 = vector.extract_strided_slice %10 {offsets = [1, 0], sizes = [1, 128], strides = [1, 1]} : vector<5x128xf32> to vector<1x128xf32>
    %94 = vector.broadcast %92 : vector<12x1xf32> to vector<12x128xf32>
    %95 = vector.broadcast %93 : vector<1x128xf32> to vector<12x128xf32>
    %96 = arith.mulf %94, %95 : vector<12x128xf32>
    %97 = arith.addf %91, %96 : vector<12x128xf32>
    %98 = vector.extract_strided_slice %86 {offsets = [0, 2], sizes = [12, 1], strides = [1, 1]} : vector<12x5xf32> to vector<12x1xf32>
    %99 = vector.extract_strided_slice %10 {offsets = [2, 0], sizes = [1, 128], strides = [1, 1]} : vector<5x128xf32> to vector<1x128xf32>
    %100 = vector.broadcast %98 : vector<12x1xf32> to vector<12x128xf32>
    %101 = vector.broadcast %99 : vector<1x128xf32> to vector<12x128xf32>
    %102 = arith.mulf %100, %101 : vector<12x128xf32>
    %103 = arith.addf %97, %102 : vector<12x128xf32>
    %104 = vector.extract_strided_slice %86 {offsets = [0, 3], sizes = [12, 1], strides = [1, 1]} : vector<12x5xf32> to vector<12x1xf32>
    %105 = vector.extract_strided_slice %10 {offsets = [3, 0], sizes = [1, 128], strides = [1, 1]} : vector<5x128xf32> to vector<1x128xf32>
    %106 = vector.broadcast %104 : vector<12x1xf32> to vector<12x128xf32>
    %107 = vector.broadcast %105 : vector<1x128xf32> to vector<12x128xf32>
    %108 = arith.mulf %106, %107 : vector<12x128xf32>
    %109 = arith.addf %103, %108 : vector<12x128xf32>
    %110 = vector.extract_strided_slice %86 {offsets = [0, 4], sizes = [12, 1], strides = [1, 1]} : vector<12x5xf32> to vector<12x1xf32>
    %111 = vector.extract_strided_slice %10 {offsets = [4, 0], sizes = [1, 128], strides = [1, 1]} : vector<5x128xf32> to vector<1x128xf32>
    %112 = vector.broadcast %110 : vector<12x1xf32> to vector<12x128xf32>
    %113 = vector.broadcast %111 : vector<1x128xf32> to vector<12x128xf32>
    %114 = arith.mulf %112, %113 : vector<12x128xf32>
    %115 = arith.addf %109, %114 : vector<12x128xf32>
    %116 = vector.extract_strided_slice %7 {offsets = [1, 0], sizes = [1, 128], strides = [1, 1]} : vector<2x128xf32> to vector<1x128xf32>
    %117 = vector.extract_strided_slice %8 {offsets = [1, 0], sizes = [1, 128], strides = [1, 1]} : vector<2x128xf32> to vector<1x128xf32>
    %118 = vector.extract_strided_slice %9 {offsets = [1, 0], sizes = [1, 128], strides = [1, 1]} : vector<2x128xf32> to vector<1x128xf32>
    %119 = vector.extract_strided_slice %115 {offsets = [0, 0], sizes = [1, 128], strides = [1, 1]} : vector<12x128xf32> to vector<1x128xf32>
    %120 = arith.mulf %119, %116 : vector<1x128xf32>
    %121 = vector.extract_strided_slice %115 {offsets = [1, 0], sizes = [1, 128], strides = [1, 1]} : vector<12x128xf32> to vector<1x128xf32>
    %122 = arith.mulf %121, %117 : vector<1x128xf32>
    %123 = arith.addf %120, %122 : vector<1x128xf32>
    %124 = vector.extract_strided_slice %115 {offsets = [2, 0], sizes = [1, 128], strides = [1, 1]} : vector<12x128xf32> to vector<1x128xf32>
    %125 = arith.mulf %124, %118 : vector<1x128xf32>
    %126 = arith.addf %123, %125 : vector<1x128xf32>
    %127 = vector.extract_strided_slice %115 {offsets = [3, 0], sizes = [1, 128], strides = [1, 1]} : vector<12x128xf32> to vector<1x128xf32>
    %128 = arith.addf %126, %127 : vector<1x128xf32>
    %c1_24 = arith.constant 1 : index
    %c0_25 = arith.constant 0 : index
    %c0_26 = arith.constant 0 : index
    %129 = vector.load %arg5[%c1_24, %c0_25, %c0_26] : memref<2x3x128xf32, #tpu.memory_space<vmem>>, vector<1x1x128xf32>
    %130 = vector.shape_cast %129 : vector<1x1x128xf32> to vector<1x128xf32>
    %131 = vector.shape_cast %128 : vector<1x128xf32> to vector<1x1x128xf32>
    tpu.vector_store %arg5[%c1_24, %c0_25, %c0_26], %131 {strides = array<i32>} : memref<2x3x128xf32, #tpu.memory_space<vmem>>, vector<1x1x128xf32>,
    %132 = vector.extract_strided_slice %115 {offsets = [4, 0], sizes = [1, 128], strides = [1, 1]} : vector<12x128xf32> to vector<1x128xf32>
    %133 = arith.mulf %132, %116 : vector<1x128xf32>
    %134 = vector.extract_strided_slice %115 {offsets = [5, 0], sizes = [1, 128], strides = [1, 1]} : vector<12x128xf32> to vector<1x128xf32>
    %135 = arith.mulf %134, %117 : vector<1x128xf32>
    %136 = arith.addf %133, %135 : vector<1x128xf32>
    %137 = vector.extract_strided_slice %115 {offsets = [6, 0], sizes = [1, 128], strides = [1, 1]} : vector<12x128xf32> to vector<1x128xf32>
    %138 = arith.mulf %137, %118 : vector<1x128xf32>
    %139 = arith.addf %136, %138 : vector<1x128xf32>
    %140 = vector.extract_strided_slice %115 {offsets = [7, 0], sizes = [1, 128], strides = [1, 1]} : vector<12x128xf32> to vector<1x128xf32>
    %141 = arith.addf %139, %140 : vector<1x128xf32>
    %c1_27 = arith.constant 1 : index
    %c1_28 = arith.constant 1 : index
    %c0_29 = arith.constant 0 : index
    %142 = vector.load %arg5[%c1_27, %c1_28, %c0_29] : memref<2x3x128xf32, #tpu.memory_space<vmem>>, vector<1x1x128xf32>
    %143 = vector.shape_cast %142 : vector<1x1x128xf32> to vector<1x128xf32>
    %144 = vector.shape_cast %141 : vector<1x128xf32> to vector<1x1x128xf32>
    tpu.vector_store %arg5[%c1_27, %c1_28, %c0_29], %144 {strides = array<i32>} : memref<2x3x128xf32, #tpu.memory_space<vmem>>, vector<1x1x128xf32>,
    %145 = vector.extract_strided_slice %115 {offsets = [8, 0], sizes = [1, 128], strides = [1, 1]} : vector<12x128xf32> to vector<1x128xf32>
    %146 = arith.mulf %145, %116 : vector<1x128xf32>
    %147 = vector.extract_strided_slice %115 {offsets = [9, 0], sizes = [1, 128], strides = [1, 1]} : vector<12x128xf32> to vector<1x128xf32>
    %148 = arith.mulf %147, %117 : vector<1x128xf32>
    %149 = arith.addf %146, %148 : vector<1x128xf32>
    %150 = vector.extract_strided_slice %115 {offsets = [10, 0], sizes = [1, 128], strides = [1, 1]} : vector<12x128xf32> to vector<1x128xf32>
    %151 = arith.mulf %150, %118 : vector<1x128xf32>
    %152 = arith.addf %149, %151 : vector<1x128xf32>
    %153 = vector.extract_strided_slice %115 {offsets = [11, 0], sizes = [1, 128], strides = [1, 1]} : vector<12x128xf32> to vector<1x128xf32>
    %154 = arith.addf %152, %153 : vector<1x128xf32>
    %c1_30 = arith.constant 1 : index
    %c2_31 = arith.constant 2 : index
    %c0_32 = arith.constant 0 : index
    %155 = vector.load %arg5[%c1_30, %c2_31, %c0_32] : memref<2x3x128xf32, #tpu.memory_space<vmem>>, vector<1x1x128xf32>
    %156 = vector.shape_cast %155 : vector<1x1x128xf32> to vector<1x128xf32>
    %157 = vector.shape_cast %154 : vector<1x128xf32> to vector<1x1x128xf32>
    tpu.vector_store %arg5[%c1_30, %c2_31, %c0_32], %157 {strides = array<i32>} : memref<2x3x128xf32, #tpu.memory_space<vmem>>, vector<1x1x128xf32>,
    return
  }
  func.func @transform_0(%arg0: i32) -> (i32, i32) {
    %c0_i32 = arith.constant 0 : i32
    %c0_i32_0 = arith.constant 0 : i32
    %c0_i32_1 = arith.constant 0 : i32
    return %c0_i32, %c0_i32_0 : i32, i32
  }
  func.func @transform_1(%arg0: i32) -> (i32, i32, i32) {
    %c0_i32 = arith.constant 0 : i32
    %c0_i32_0 = arith.constant 0 : i32
    %c0_i32_1 = arith.constant 0 : i32
    return %c0_i32, %c0_i32_0, %arg0 : i32, i32, i32
  }
  func.func @transform_2(%arg0: i32) -> (i32, i32, i32) {
    %c0_i32 = arith.constant 0 : i32
    %c0_i32_0 = arith.constant 0 : i32
    %c0_i32_1 = arith.constant 0 : i32
    %c0_i32_2 = arith.constant 0 : i32
    return %c0_i32, %c0_i32_0, %c0_i32_1 : i32, i32, i32
  }
  func.func @transform_3(%arg0: i32) -> (i32, i32) {
    %c0_i32 = arith.constant 0 : i32
    %c0_i32_0 = arith.constant 0 : i32
    return %c0_i32, %arg0 : i32, i32
  }
  func.func @transform_4(%arg0: i32) -> (i32, i32, i32) {
    %c0_i32 = arith.constant 0 : i32
    %c0_i32_0 = arith.constant 0 : i32
    %c0_i32_1 = arith.constant 0 : i32
    return %c0_i32, %c0_i32_0, %arg0 : i32, i32, i32
  }
}

</mosaic_0001>

<llo_original>
// kernel: tpu_custom_call.1
$region0: #{tpu_custom_call.1}
  #allocation0 [shape = 'u32[]', space=smem, size = 0x4, offset = 0x4, fixed_abs, tag = 'smem constant byte address 0x4 - core index']
  #allocation1 [shape = 'u32[144,128]{1,0:T(1,128)}', space=vmem, size = 0x12000, scoped, tag = 'internal scratch']
  %s0 = inlined_call_operand.vmem [shape: f32[2,49], index: 0, kind: input, shape index: {}]
  %s1 = inlined_call_operand.hbm [shape: f32[3,49,256], index: 1, kind: input, shape index: {}]
  %s2 = inlined_call_operand.vmem [shape: f32[2,12,5], index: 2, kind: input, shape index: {}]
  %s3 = inlined_call_operand.vmem [shape: f32[5,256], index: 3, kind: input, shape index: {}]
  %s4 = inlined_call_operand.vmem [shape: f32[2,3,256], index: 4, kind: output, shape index: {}]
  %s5 = sld [smem:[#allocation0]]
  $region90: #{tpu_custom_call.1} parent=0
    _
  %s7 = ssub.s32 1, %s5
  %s8 = scalar_select 0, %s7, %s5
  $region1: #{tpu_custom_call.1} parent=0
    #allocation2 [shape = 'u8[172032]{0}', space=vmem, size = 0x2a000, scoped, tag = 'input window, operand 1']
    #allocation3 [shape = 's32[2]{0}', space=sflag, size = 0x8, scoped, tag = 'scoped memory for tpu_custom_call.1']
    #allocation4 [shape = 'u8[8192]{0}', space=vmem, size = 0x2000, scoped, tag = 'output window, operand 0']
    %9 = vsyncpa [#allocation3], 0
    %s10 = scalar_lea.sflag [#allocation3], 1
    %11 = vsyncpa %s10, 0
    loop: start=0, step=1, limit=4
    $region2: #{tpu_custom_call.1} parent=1 // loop_pre_header
      _
    $region3: #{tpu_custom_call.1} parent=1 // loop_header
      %s13 = sphi 0, %s17
      %p14 = scmp.ge.s32.totalorder %s13, 4
      %s21 = sphi 0, %s21
      %s23 = sphi 0, %s21
      %s24 = sphi 0, %s23
      %s38 = sphi 0, %s24
      %s44 = sphi 0, %s46
      %s47 = sphi 0, %s44
      %s48 = sphi 0, %s47
      %s64 = sphi 0, %s48
      %s68 = sphi 0, %s68
      %s70 = sphi 0, %s68
      %s71 = sphi 0, %s70
      %s85 = sphi 0, %s71
      %s91 = sphi 0, %s93
      %s94 = sphi 0, %s91
      %s95 = sphi 0, %s94
      %s111 = sphi 0, %s95
      %s117 = sphi 0, %s119
      %s120 = sphi 0, %s117
      %s121 = sphi 0, %s120
      %s137 = sphi 0, %s121
    $region4: #{tpu_custom_call.1} parent=1 // loop_header_branch
      %16 = sbr.rel (%p14) target = $region8
    $region5: #{tpu_custom_call.1} parent=1 // loop_body
      %s18 = ssub.s32 %s13, 1
      %s19 = ssub.s32 %s13, 2
      %s20 = sadd.s32 %s13, 1
      %s22 = sadd.s32 %s21, 1
      %p25 = scmp.eq.s32.totalorder %s13, 1
      %p26 = scmp.ne.s32.totalorder %s21, %s23
      %p27 = scmp.eq.s32.totalorder %s13, 0
      %p28 = por %p26, %p27
      %p29 = scmp.ne.s32.totalorder %s21, %s23
      %p30 = scmp.eq.s32.totalorder %s18, 1
      %p31 = por %p29, %p30
      %p32 = scmp.ne.s32.totalorder %s23, %s24
      %p33 = scmp.eq.s32.totalorder %s18, 0
      %p34 = por %p32, %p33
      %p35 = scmp.ne.s32.totalorder %s23, %s24
      %p36 = scmp.eq.s32.totalorder %s19, 1
      %p37 = por %p35, %p36
      %p39 = scmp.ne.s32.totalorder %s24, %s38
      %p40 = scmp.eq.s32.totalorder %s19, 0
      %p41 = por %p39, %p40
      %s42 = ssub.s32 %s13, %s20
      %p43 = scmp.eq.s32.totalorder %s42, 0
      %s45 = sadd.s32 %s44, 1
      %s46 = scalar_select %p43, %s44, %s45
      %p49 = pneg %p43
      %p50 = scmp.eq.s32.totalorder %s13, 1
      %p51 = por %p49, %p50
      %p52 = scmp.ne.s32.totalorder %s44, %s47
      %p53 = scmp.eq.s32.totalorder %s13, 0
      %p54 = por %p52, %p53
      %p55 = scmp.ne.s32.totalorder %s44, %s47
      %p56 = scmp.eq.s32.totalorder %s18, 1
      %p57 = por %p55, %p56
      %p58 = scmp.ne.s32.totalorder %s47, %s48
      %p59 = scmp.eq.s32.totalorder %s18, 0
      %p60 = por %p58, %p59
      %p61 = scmp.ne.s32.totalorder %s47, %s48
      %p62 = scmp.eq.s32.totalorder %s19, 1
      %p63 = por %p61, %p62
      %p65 = scmp.ne.s32.totalorder %s48, %s64
      %p66 = scmp.eq.s32.totalorder %s19, 0
      %p67 = por %p65, %p66
      %s69 = sadd.s32 %s68, 1
      %p72 = scmp.eq.s32.totalorder %s13, 1
      %p73 = scmp.ne.s32.totalorder %s68, %s70
      %p74 = scmp.eq.s32.totalorder %s13, 0
      %p75 = por %p73, %p74
      %p76 = scmp.ne.s32.totalorder %s68, %s70
      %p77 = scmp.eq.s32.totalorder %s18, 1
      %p78 = por %p76, %p77
      %p79 = scmp.ne.s32.totalorder %s70, %s71
      %p80 = scmp.eq.s32.totalorder %s18, 0
      %p81 = por %p79, %p80
      %p82 = scmp.ne.s32.totalorder %s70, %s71
      %p83 = scmp.eq.s32.totalorder %s19, 1
      %p84 = por %p82, %p83
      %p86 = scmp.ne.s32.totalorder %s71, %s85
      %p87 = scmp.eq.s32.totalorder %s19, 0
      %p88 = por %p86, %p87
      %s89 = ssub.s32 %s13, %s20
      %p90 = scmp.eq.s32.totalorder %s89, 0
      %s92 = sadd.s32 %s91, 1
      %s93 = scalar_select %p90, %s91, %s92
      %p96 = pneg %p90
      %p97 = scmp.eq.s32.totalorder %s13, 1
      %p98 = por %p96, %p97
      %p99 = scmp.ne.s32.totalorder %s91, %s94
      %p100 = scmp.eq.s32.totalorder %s13, 0
      %p101 = por %p99, %p100
      %p102 = scmp.ne.s32.totalorder %s91, %s94
      %p103 = scmp.eq.s32.totalorder %s18, 1
      %p104 = por %p102, %p103
      %p105 = scmp.ne.s32.totalorder %s94, %s95
      %p106 = scmp.eq.s32.totalorder %s18, 0
      %p107 = por %p105, %p106
      %p108 = scmp.ne.s32.totalorder %s94, %s95
      %p109 = scmp.eq.s32.totalorder %s19, 1
      %p110 = por %p108, %p109
      %p112 = scmp.ne.s32.totalorder %s95, %s111
      %p113 = scmp.eq.s32.totalorder %s19, 0
      %p114 = por %p112, %p113
      %s115 = ssub.s32 %s13, %s20
      %p116 = scmp.eq.s32.totalorder %s115, 0
      %s118 = sadd.s32 %s117, 1
      %s119 = scalar_select %p116, %s117, %s118
      %p122 = pneg %p116
      %p123 = scmp.eq.s32.totalorder %s13, 1
      %p124 = por %p122, %p123
      %p125 = scmp.ne.s32.totalorder %s117, %s120
      %p126 = scmp.eq.s32.totalorder %s13, 0
      %p127 = por %p125, %p126
      %p128 = scmp.ne.s32.totalorder %s117, %s120
      %p129 = scmp.eq.s32.totalorder %s18, 1
      %p130 = por %p128, %p129
      %p131 = scmp.ne.s32.totalorder %s120, %s121
      %p132 = scmp.eq.s32.totalorder %s18, 0
      %p133 = por %p131, %p132
      %p134 = scmp.ne.s32.totalorder %s120, %s121
      %p135 = scmp.eq.s32.totalorder %s19, 1
      %p136 = por %p134, %p135
      %p138 = scmp.ne.s32.totalorder %s121, %s137
      %p139 = scmp.eq.s32.totalorder %s19, 0
      %p140 = por %p138, %p139
      %p141 = scmp.le.s32.totalorder 1, %s13
      %p142 = scmp.lt.s32.totalorder %s13, 3
      %p143 = pnand %p141, %p142
      %p144 = pneg %p143
      // Predicated region
      $region9: #{tpu_custom_call.1} parent=5 // pred_check
        _
      $region10: #{tpu_custom_call.1} parent=5 // pred_check_branch
        %146 = sbr.rel (%p143) target = $region12
      $region11: #{tpu_custom_call.1} parent=5 // pred_region
        %s147 = ssub.s32 %s13, 1
        // Predicated region
        $region13: #{tpu_custom_call.1} parent=11 // pred_check
          %p148 = pneg %p34
        $region14: #{tpu_custom_call.1} parent=11 // pred_check_branch
          %150 = sbr.rel (%p148) target = $region16
        $region15: #{tpu_custom_call.1} parent=11 // pred_region
          _
        $region16: #{tpu_custom_call.1} parent=11 // pred_fallthru
          _
        // Predicated region
        $region17: #{tpu_custom_call.1} parent=11 // pred_check
          %p151 = pneg %p81
        $region18: #{tpu_custom_call.1} parent=11 // pred_check_branch
          %153 = sbr.rel (%p151) target = $region20
        $region19: #{tpu_custom_call.1} parent=11 // pred_region
          _
        $region20: #{tpu_custom_call.1} parent=11 // pred_fallthru
          _
      $region12: #{tpu_custom_call.1} parent=5 // pred_fallthru
        _
      %p154 = scmp.lt.s32.totalorder %s13, 2
      // Predicated region
      $region21: #{tpu_custom_call.1} parent=5 // pred_check
        %p155 = pneg %p154
      $region22: #{tpu_custom_call.1} parent=5 // pred_check_branch
        %157 = sbr.rel (%p155) target = $region24
      $region23: #{tpu_custom_call.1} parent=5 // pred_region
        // Predicated region
        $region25: #{tpu_custom_call.1} parent=23 // pred_check
          %p158 = pneg %p54
        $region26: #{tpu_custom_call.1} parent=23 // pred_check_branch
          %160 = sbr.rel (%p158) target = $region28
        $region27: #{tpu_custom_call.1} parent=23 // pred_region
          %s161 = sand.u32 %s44, 1
          %s162 = scalar_lea.sflag [#allocation3], %s161
          %s163 = sand.u32 %s44, 1
          %s164 = smul.addr %s163, 168
          %s165 = scalar_lea.vmem [#allocation2], %s164
          %s167 = ssub.s32 2688, 2688
          %168 = vsyncadd %s162, %s167
          %s169 = smul.addr %s13, 128
          %s170 = scalar_lea.hbm %s1, %s169
          %s171 = sshll.u32 %s165, 4
          %s172 = int_to_ptr.vmem [resolvable:$true] %s171
          %177 = dma.hbm_to_vmem [thread:$0]  %s170, 2688, %s172, %s162, 256, 128, 8
        $region28: #{tpu_custom_call.1} parent=23 // pred_fallthru
          _
        // Predicated region
        $region29: #{tpu_custom_call.1} parent=23 // pred_check
          %p178 = pneg %p101
        $region30: #{tpu_custom_call.1} parent=23 // pred_check_branch
          %180 = sbr.rel (%p178) target = $region32
        $region31: #{tpu_custom_call.1} parent=23 // pred_region
          %p181 = scmp.lt.s32.totalorder %s13, 1
          %s182 = scalar_select %p181, %s13, 1
          %s183 = smul.addr %s182, 8
          %s184 = scalar_lea.vmem %s3, %s183
        $region32: #{tpu_custom_call.1} parent=23 // pred_fallthru
          _
      $region24: #{tpu_custom_call.1} parent=5 // pred_fallthru
        _
      %p185 = scmp.le.s32.totalorder 1, %s13
      %p186 = scmp.lt.s32.totalorder %s13, 3
      %p187 = pnand %p185, %p186
      %p188 = pneg %p187
      // Predicated region
      $region33: #{tpu_custom_call.1} parent=5 // pred_check
        _
      $region34: #{tpu_custom_call.1} parent=5 // pred_check_branch
        %190 = sbr.rel (%p187) target = $region36
      $region35: #{tpu_custom_call.1} parent=5 // pred_region
        %s191 = ssub.s32 %s13, 1
        %s192 = sand.u32 %s47, 1
        %s193 = scalar_lea.sflag [#allocation3], %s192
        %s194 = sand.u32 %s47, 1
        %s195 = smul.addr %s194, 168
        %s196 = scalar_lea.vmem [#allocation2], %s195
        // Predicated region
        $region37: #{tpu_custom_call.1} parent=35 // pred_check
          %p197 = pneg %p60
        $region38: #{tpu_custom_call.1} parent=35 // pred_check_branch
          %199 = sbr.rel (%p197) target = $region40
        $region39: #{tpu_custom_call.1} parent=35 // pred_region
          %200 = dma.done %s193, 2688
        $region40: #{tpu_custom_call.1} parent=35 // pred_fallthru
          _
        %p201 = pneg %p34
        %p202 = pneg %p31
        %s203 = sand.u32 %s47, 1
        %s204 = scalar_lea.sflag [#allocation3], %s203
        %s205 = sand.u32 %s47, 1
        %s206 = smul.addr %s205, 168
        %s207 = scalar_lea.vmem [#allocation2], %s206
        %p208 = pneg %p60
        %p209 = pneg %p57
        %p210 = pneg %p81
        %p211 = pneg %p78
        %p212 = scmp.lt.s32.totalorder %s18, 1
        %s213 = scalar_select %p212, %s18, 1
        %s214 = smul.addr %s213, 8
        %s215 = scalar_lea.vmem %s3, %s214
        %p216 = pneg %p107
        %p217 = pneg %p104
        %p218 = pneg %p133
        %p219 = pneg %p130
        %s220 = sand.u32 %s120, 1
        %s221 = sand.u32 %s120, 1
        %s222 = smul.addr %s221, 8
        %s223 = scalar_lea.vmem [#allocation4], %s222
        %p224 = scmp.lt.s32.totalorder %s18, 1
        %s225 = scalar_select %p224, %s18, 1
        %s226 = smul.addr %s225, 8
        %s227 = scalar_lea.vmem %s3, %s226
        %v228 = vld [vmem:[%s196] sm:$0xff]
        %v229 = vld [vmem:[%s196 + $0x8] sm:$0xff]
        %v230 = vld [vmem:[%s196 + $0x10] sm:$0xff]
        %v231 = vld [vmem:[%s196 + $0x18] sm:$0xff]
        %v232 = vld [vmem:[%s196 + $0x20] sm:$0xff]
        %v233 = vld [vmem:[%s196 + $0x28] sm:$0xff]
        %v234 = vld [vmem:[%s196 + $0x30] sm:$0x1]
        %s235 = scalar_lea.vmem %s196, 56 [#allocation2]
        %v236 = vld [vmem:[%s235] sm:$0xff]
        %v237 = vld [vmem:[%s235 + $0x8] sm:$0xff]
        %v238 = vld [vmem:[%s235 + $0x10] sm:$0xff]
        %v239 = vld [vmem:[%s235 + $0x18] sm:$0xff]
        %v240 = vld [vmem:[%s235 + $0x20] sm:$0xff]
        %v241 = vld [vmem:[%s235 + $0x28] sm:$0xff]
        %v242 = vld [vmem:[%s235 + $0x30] sm:$0x1]
        %s243 = scalar_lea.vmem %s196, 112 [#allocation2]
        %v244 = vld [vmem:[%s243] sm:$0xff]
        %v245 = vld [vmem:[%s243 + $0x8] sm:$0xff]
        %v246 = vld [vmem:[%s243 + $0x10] sm:$0xff]
        %v247 = vld [vmem:[%s243 + $0x18] sm:$0xff]
        %v248 = vld [vmem:[%s243 + $0x20] sm:$0xff]
        %v249 = vld [vmem:[%s243 + $0x28] sm:$0xff]
        %v250 = vld [vmem:[%s243 + $0x30] sm:$0x1]
        %v251 = vld [vmem:[%s0] sm:$0x3]
        %vm252 = vcmask 400384
        %v254 = vsel %vm252, %v251, 0
        %vm256 = vcmask 1040384
        %v258 = vsel %vm256, %v234, 0
        %260 = vmatprep.subr.mxu0 0.0
        %261 = vmatpush1.msra.mxu0 %v228
        %262 = vmatprep.subr.mxu0 0.0
        %263 = vmatpush1.msra.mxu0 %v229
        %264 = vmatprep.subr.mxu0 0.0
        %265 = vmatpush1.msra.mxu0 %v230
        %266 = vmatprep.subr.mxu0 0.0
        %267 = vmatpush1.msra.mxu0 %v231
        %268 = vmatprep.subr.mxu0 0.0
        %269 = vmatpush1.msra.mxu0 %v232
        %270 = vmatprep.subr.mxu0 0.0
        %271 = vmatpush1.msra.mxu0 %v233
        %272 = vmatprep.subr.mxu0 0.0
        %273 = vmatpush1.msra.mxu0 %v258
        %274 = vmatprep.subr.mxu0 0.0
        %275 = vmatpush1.msra.mxu0 0.0
        %276 = vmatprep.subr.mxu0 0.0
        %277 = vmatpush1.msra.mxu0 0.0
        %278 = vmatprep.subr.mxu0 0.0
        %279 = vmatpush1.msra.mxu0 0.0
        %280 = vmatprep.subr.mxu0 0.0
        %281 = vmatpush1.msra.mxu0 0.0
        %282 = vmatprep.subr.mxu0 0.0
        %283 = vmatpush1.msra.mxu0 0.0
        %284 = vmatprep.subr.mxu0 0.0
        %285 = vmatpush1.msra.mxu0 0.0
        %286 = vmatprep.subr.mxu0 0.0
        %287 = vmatpush1.msra.mxu0 0.0
        %288 = vmatprep.subr.mxu0 0.0
        %289 = vmatpush1.msra.mxu0 0.0
        %290 = vmatprep.subr.mxu0 0.0
        %291 = vmatpush1.msra.mxu0 0.0
        %292 = vmatprep.subr.mxu0 0.0
        %293 = vmatpush1.msra.mxu0 0.0
        %294 = vmatprep.subr.mxu0 0.0
        %295 = vmatpush1.msra.mxu0 0.0
        %296 = vmatprep.subr.mxu0 0.0
        %297 = vmatpush1.msra.mxu0 0.0
        %298 = vmatprep.subr.mxu0 0.0
        %299 = vmatpush1.msra.mxu0 0.0
        %300 = vmatprep.subr.mxu0 0.0
        %301 = vmatpush1.msra.mxu0 0.0
        %302 = vmatprep.subr.mxu0 0.0
        %303 = vmatpush1.msra.mxu0 0.0
        %304 = vmatprep.subr.mxu0 0.0
        %305 = vmatpush1.msra.mxu0 0.0
        %306 = vmatprep.subr.mxu0 0.0
        %307 = vmatpush1.msra.mxu0 0.0
        %308 = vmatprep.subr.mxu0 0.0
        %309 = vmatpush1.msra.mxu0 0.0
        %310 = vmatprep.subr.mxu0 0.0
        %311 = vmatpush1.msra.mxu0 0.0
        %312 = vmatprep.subr.mxu0 0.0
        %313 = vmatpush1.msra.mxu0 0.0
        %314 = vmatprep.subr.mxu0 0.0
        %315 = vmatpush1.msra.mxu0 0.0
        %316 = vmatprep.subr.mxu0 0.0
        %317 = vmatpush1.msra.mxu0 0.0
        %318 = vmatprep.subr.mxu0 0.0
        %319 = vmatpush1.msra.mxu0 0.0
        %320 = vmatprep.subr.mxu0 0.0
        %321 = vmatpush1.msra.mxu0 0.0
        %322 = vmatprep.subr.mxu0 0.0
        %323 = vmatpush1.msra.mxu0 0.0
        %324 = vmatprep.mubr.f32.mxu0 0.0
        %325 = vmatmul.mubr.f32.gmra.mrb[0].mxu0 %v254
        %v326 = vpop.f32.mrb[0].mxu0
        %v327 = vadd.f32 0.0, %v326
        %v328 = vpop.f32.mrb[0].mxu0
        %329 = vdwg.mxu0
        %v331 = vsel %vm256, %v242, 0
        %333 = vmatprep.subr.mxu0 0.0
        %334 = vmatpush1.msra.mxu0 %v236
        %335 = vmatprep.subr.mxu0 0.0
        %336 = vmatpush1.msra.mxu0 %v237
        %337 = vmatprep.subr.mxu0 0.0
        %338 = vmatpush1.msra.mxu0 %v238
        %339 = vmatprep.subr.mxu0 0.0
        %340 = vmatpush1.msra.mxu0 %v239
        %341 = vmatprep.subr.mxu0 0.0
        %342 = vmatpush1.msra.mxu0 %v240
        %343 = vmatprep.subr.mxu0 0.0
        %344 = vmatpush1.msra.mxu0 %v241
        %345 = vmatprep.subr.mxu0 0.0
        %346 = vmatpush1.msra.mxu0 %v331
        %347 = vmatprep.subr.mxu0 0.0
        %348 = vmatpush1.msra.mxu0 0.0
        %349 = vmatprep.subr.mxu0 0.0
        %350 = vmatpush1.msra.mxu0 0.0
        %351 = vmatprep.subr.mxu0 0.0
        %352 = vmatpush1.msra.mxu0 0.0
        %353 = vmatprep.subr.mxu0 0.0
        %354 = vmatpush1.msra.mxu0 0.0
        %355 = vmatprep.subr.mxu0 0.0
        %356 = vmatpush1.msra.mxu0 0.0
        %357 = vmatprep.subr.mxu0 0.0
        %358 = vmatpush1.msra.mxu0 0.0
        %359 = vmatprep.subr.mxu0 0.0
        %360 = vmatpush1.msra.mxu0 0.0
        %361 = vmatprep.subr.mxu0 0.0
        %362 = vmatpush1.msra.mxu0 0.0
        %363 = vmatprep.subr.mxu0 0.0
        %364 = vmatpush1.msra.mxu0 0.0
        %365 = vmatprep.subr.mxu0 0.0
        %366 = vmatpush1.msra.mxu0 0.0
        %367 = vmatprep.subr.mxu0 0.0
        %368 = vmatpush1.msra.mxu0 0.0
        %369 = vmatprep.subr.mxu0 0.0
        %370 = vmatpush1.msra.mxu0 0.0
        %371 = vmatprep.subr.mxu0 0.0
        %372 = vmatpush1.msra.mxu0 0.0
        %373 = vmatprep.subr.mxu0 0.0
        %374 = vmatpush1.msra.mxu0 0.0
        %375 = vmatprep.subr.mxu0 0.0
        %376 = vmatpush1.msra.mxu0 0.0
        %377 = vmatprep.subr.mxu0 0.0
        %378 = vmatpush1.msra.mxu0 0.0
        %379 = vmatprep.subr.mxu0 0.0
        %380 = vmatpush1.msra.mxu0 0.0
        %381 = vmatprep.subr.mxu0 0.0
        %382 = vmatpush1.msra.mxu0 0.0
        %383 = vmatprep.subr.mxu0 0.0
        %384 = vmatpush1.msra.mxu0 0.0
        %385 = vmatprep.subr.mxu0 0.0
        %386 = vmatpush1.msra.mxu0 0.0
        %387 = vmatprep.subr.mxu0 0.0
        %388 = vmatpush1.msra.mxu0 0.0
        %389 = vmatprep.subr.mxu0 0.0
        %390 = vmatpush1.msra.mxu0 0.0
        %391 = vmatprep.subr.mxu0 0.0
        %392 = vmatpush1.msra.mxu0 0.0
        %393 = vmatprep.subr.mxu0 0.0
        %394 = vmatpush1.msra.mxu0 0.0
        %395 = vmatprep.subr.mxu0 0.0
        %396 = vmatpush1.msra.mxu0 0.0
        %397 = vmatprep.mubr.f32.mxu0 0.0
        %398 = vmatmul.mubr.f32.gmra.mrb[0].mxu0 %v254
        %v399 = vpop.f32.mrb[0].mxu0
        %v400 = vadd.f32 0.0, %v399
        %v401 = vpop.f32.mrb[0].mxu0
        %402 = vdwg.mxu0
        %v404 = vsel %vm256, %v250, 0
        %406 = vmatprep.subr.mxu0 0.0
        %407 = vmatpush1.msra.mxu0 %v244
        %408 = vmatprep.subr.mxu0 0.0
        %409 = vmatpush1.msra.mxu0 %v245
        %410 = vmatprep.subr.mxu0 0.0
        %411 = vmatpush1.msra.mxu0 %v246
        %412 = vmatprep.subr.mxu0 0.0
        %413 = vmatpush1.msra.mxu0 %v247
        %414 = vmatprep.subr.mxu0 0.0
        %415 = vmatpush1.msra.mxu0 %v248
        %416 = vmatprep.subr.mxu0 0.0
        %417 = vmatpush1.msra.mxu0 %v249
        %418 = vmatprep.subr.mxu0 0.0
        %419 = vmatpush1.msra.mxu0 %v404
        %420 = vmatprep.subr.mxu0 0.0
        %421 = vmatpush1.msra.mxu0 0.0
        %422 = vmatprep.subr.mxu0 0.0
        %423 = vmatpush1.msra.mxu0 0.0
        %424 = vmatprep.subr.mxu0 0.0
        %425 = vmatpush1.msra.mxu0 0.0
        %426 = vmatprep.subr.mxu0 0.0
        %427 = vmatpush1.msra.mxu0 0.0
        %428 = vmatprep.subr.mxu0 0.0
        %429 = vmatpush1.msra.mxu0 0.0
        %430 = vmatprep.subr.mxu0 0.0
        %431 = vmatpush1.msra.mxu0 0.0
        %432 = vmatprep.subr.mxu0 0.0
        %433 = vmatpush1.msra.mxu0 0.0
        %434 = vmatprep.subr.mxu0 0.0
        %435 = vmatpush1.msra.mxu0 0.0
        %436 = vmatprep.subr.mxu0 0.0
        %437 = vmatpush1.msra.mxu0 0.0
        %438 = vmatprep.subr.mxu0 0.0
        %439 = vmatpush1.msra.mxu0 0.0
        %440 = vmatprep.subr.mxu0 0.0
        %441 = vmatpush1.msra.mxu0 0.0
        %442 = vmatprep.subr.mxu0 0.0
        %443 = vmatpush1.msra.mxu0 0.0
        %444 = vmatprep.subr.mxu0 0.0
        %445 = vmatpush1.msra.mxu0 0.0
        %446 = vmatprep.subr.mxu0 0.0
        %447 = vmatpush1.msra.mxu0 0.0
        %448 = vmatprep.subr.mxu0 0.0
        %449 = vmatpush1.msra.mxu0 0.0
        %450 = vmatprep.subr.mxu0 0.0
        %451 = vmatpush1.msra.mxu0 0.0
        %452 = vmatprep.subr.mxu0 0.0
        %453 = vmatpush1.msra.mxu0 0.0
        %454 = vmatprep.subr.mxu0 0.0
        %455 = vmatpush1.msra.mxu0 0.0
        %456 = vmatprep.subr.mxu0 0.0
        %457 = vmatpush1.msra.mxu0 0.0
        %458 = vmatprep.subr.mxu0 0.0
        %459 = vmatpush1.msra.mxu0 0.0
        %460 = vmatprep.subr.mxu0 0.0
        %461 = vmatpush1.msra.mxu0 0.0
        %462 = vmatprep.subr.mxu0 0.0
        %463 = vmatpush1.msra.mxu0 0.0
        %464 = vmatprep.subr.mxu0 0.0
        %465 = vmatpush1.msra.mxu0 0.0
        %466 = vmatprep.subr.mxu0 0.0
        %467 = vmatpush1.msra.mxu0 0.0
        %468 = vmatprep.subr.mxu0 0.0
        %469 = vmatpush1.msra.mxu0 0.0
        %470 = vmatprep.mubr.f32.mxu0 0.0
        %471 = vmatmul.mubr.f32.gmra.mrb[0].mxu0 %v254
        %v472 = vpop.f32.mrb[0].mxu0
        %v473 = vadd.f32 0.0, %v472
        %v474 = vpop.f32.mrb[0].mxu0
        %475 = vdwg.mxu0
        %v476 = vld [vmem:[%s227] sm:$0x1f]
        %v477 = vld [vmem:[%s2] sm:$0xff]
        %v478 = vld [vmem:[%s2 + $0x8] sm:$0xf]
        %v479 = vld [vmem:[%s2 + $0x10] sm:$0xff]
        %v480 = vld [vmem:[%s2 + $0x18] sm:$0xf]
        %482 = vset.pattern.permute.xlu0 0
        %483 = vperm.xlu0 %482, %v477
        %v484 = vpop.permute.xlu0 %483
        %487 = vset.pattern.permute.xlu0 0
        %488 = vperm.xlu0 %487, %v478
        %v489 = vpop.permute.xlu0 %488
        %v491 = vlaneseq
        %v492 = vshrl.u32 %v491, 7
        %v493 = vsub.s32 0, %v492
        %v494 = vrot.slane %v476, %v493
        %v495 = vmul.f32 %v484, %v494
        %v496 = vmul.f32 %v489, %v494
        %497 = vset.pattern.permute.xlu0 1
        %498 = vperm.xlu0 %497, %v477
        %v499 = vpop.permute.xlu0 %498
        %501 = vset.pattern.permute.xlu0 1
        %502 = vperm.xlu0 %501, %v478
        %v503 = vpop.permute.xlu0 %502
        %v505 = vlaneseq
        %v506 = vshrl.u32 %v505, 7
        %v507 = vsub.s32 1, %v506
        %v508 = vrot.slane %v476, %v507
        %v509 = vmul.f32 %v499, %v508
        %v510 = vmul.f32 %v503, %v508
        %v511 = vadd.f32 %v495, %v509
        %v512 = vadd.f32 %v496, %v510
        %513 = vset.pattern.permute.xlu0 2
        %514 = vperm.xlu0 %513, %v477
        %v515 = vpop.permute.xlu0 %514
        %517 = vset.pattern.permute.xlu0 2
        %518 = vperm.xlu0 %517, %v478
        %v519 = vpop.permute.xlu0 %518
        %v521 = vlaneseq
        %v522 = vshrl.u32 %v521, 7
        %v523 = vsub.s32 2, %v522
        %v524 = vrot.slane %v476, %v523
        %v525 = vmul.f32 %v515, %v524
        %v526 = vmul.f32 %v519, %v524
        %v527 = vadd.f32 %v511, %v525
        %v528 = vadd.f32 %v512, %v526
        %529 = vset.pattern.permute.xlu0 3
        %530 = vperm.xlu0 %529, %v477
        %v531 = vpop.permute.xlu0 %530
        %533 = vset.pattern.permute.xlu0 3
        %534 = vperm.xlu0 %533, %v478
        %v535 = vpop.permute.xlu0 %534
        %v537 = vlaneseq
        %v538 = vshrl.u32 %v537, 7
        %v539 = vsub.s32 3, %v538
        %v540 = vrot.slane %v476, %v539
        %v541 = vmul.f32 %v531, %v540
        %v542 = vmul.f32 %v535, %v540
        %v543 = vadd.f32 %v527, %v541
        %v544 = vadd.f32 %v528, %v542
        %545 = vset.pattern.permute.xlu0 4
        %546 = vperm.xlu0 %545, %v477
        %v547 = vpop.permute.xlu0 %546
        %549 = vset.pattern.permute.xlu0 4
        %550 = vperm.xlu0 %549, %v478
        %v551 = vpop.permute.xlu0 %550
        %v553 = vlaneseq
        %v554 = vshrl.u32 %v553, 7
        %v555 = vsub.s32 4, %v554
        %v556 = vrot.slane %v476, %v555
        %v557 = vmul.f32 %v547, %v556
        %v558 = vmul.f32 %v551, %v556
        %v559 = vadd.f32 %v543, %v557
        %v560 = vadd.f32 %v544, %v558
        %v561 = vmul.f32 %v559, %v327
        %v563 = vrot.slane %v400, 7
        %v565 = vmul.f32 %v559, %v563
        %v567 = vrot.slane %v565, 1
        %v569 = vadd.f32 %v561, %v567
        %v571 = vrot.slane %v473, 6
        %v573 = vmul.f32 %v559, %v571
        %v575 = vrot.slane %v573, 2
        %v577 = vadd.f32 %v569, %v575
        %v579 = vrot.slane %v559, 3
        %v581 = vadd.f32 %v577, %v579
        %582 = vst [vmem:[%s223] sm:$0x1] %v581
        %v584 = vrot.slane %v327, 4
        %v586 = vmul.f32 %v559, %v584
        %v587 = vrot.slane %v400, 3
        %v589 = vmul.f32 %v559, %v587
        %v591 = vrot.slane %v589, 1
        %v593 = vadd.f32 %v586, %v591
        %v594 = vrot.slane %v473, 2
        %v596 = vmul.f32 %v559, %v594
        %v598 = vrot.slane %v596, 2
        %v600 = vadd.f32 %v593, %v598
        %v601 = vadd.f32 %v600, %v579
        %602 = vst [vmem:[%s223 - $0x3] sm:$0x10] %v601
        %v603 = vmul.f32 %v560, %v327
        %v604 = vmul.f32 %v560, %v563
        %v606 = vrot.slane %v604, 1
        %v608 = vadd.f32 %v603, %v606
        %v609 = vmul.f32 %v560, %v571
        %v611 = vrot.slane %v609, 2
        %v613 = vadd.f32 %v608, %v611
        %v615 = vrot.slane %v560, 3
        %v617 = vadd.f32 %v613, %v615
        %618 = vst [vmem:[%s223 + $0x2] sm:$0x1] %v617
        %620 = vset.pattern.permute.xlu0 0
        %621 = vperm.xlu0 %620, %v479
        %v622 = vpop.permute.xlu0 %621
        %625 = vset.pattern.permute.xlu0 0
        %626 = vperm.xlu0 %625, %v480
        %v627 = vpop.permute.xlu0 %626
        %v629 = vmul.f32 %v622, %v494
        %v630 = vmul.f32 %v627, %v494
        %631 = vset.pattern.permute.xlu0 1
        %632 = vperm.xlu0 %631, %v479
        %v633 = vpop.permute.xlu0 %632
        %635 = vset.pattern.permute.xlu0 1
        %636 = vperm.xlu0 %635, %v480
        %v637 = vpop.permute.xlu0 %636
        %v639 = vmul.f32 %v633, %v508
        %v640 = vmul.f32 %v637, %v508
        %v641 = vadd.f32 %v629, %v639
        %v642 = vadd.f32 %v630, %v640
        %643 = vset.pattern.permute.xlu0 2
        %644 = vperm.xlu0 %643, %v479
        %v645 = vpop.permute.xlu0 %644
        %647 = vset.pattern.permute.xlu0 2
        %648 = vperm.xlu0 %647, %v480
        %v649 = vpop.permute.xlu0 %648
        %v651 = vmul.f32 %v645, %v524
        %v652 = vmul.f32 %v649, %v524
        %v653 = vadd.f32 %v641, %v651
        %v654 = vadd.f32 %v642, %v652
        %655 = vset.pattern.permute.xlu0 3
        %656 = vperm.xlu0 %655, %v479
        %v657 = vpop.permute.xlu0 %656
        %659 = vset.pattern.permute.xlu0 3
        %660 = vperm.xlu0 %659, %v480
        %v661 = vpop.permute.xlu0 %660
        %v663 = vmul.f32 %v657, %v540
        %v664 = vmul.f32 %v661, %v540
        %v665 = vadd.f32 %v653, %v663
        %v666 = vadd.f32 %v654, %v664
        %667 = vset.pattern.permute.xlu0 4
        %668 = vperm.xlu0 %667, %v479
        %v669 = vpop.permute.xlu0 %668
        %671 = vset.pattern.permute.xlu0 4
        %672 = vperm.xlu0 %671, %v480
        %v673 = vpop.permute.xlu0 %672
        %v675 = vmul.f32 %v669, %v556
        %v676 = vmul.f32 %v673, %v556
        %v677 = vadd.f32 %v665, %v675
        %v678 = vadd.f32 %v666, %v676
        %v679 = vrot.slane %v327, 1
        %v681 = vmul.f32 %v677, %v679
        %v682 = vmul.f32 %v677, %v400
        %v684 = vrot.slane %v682, 1
        %v686 = vadd.f32 %v681, %v684
        %v687 = vrot.slane %v473, 7
        %v689 = vmul.f32 %v677, %v687
        %v691 = vrot.slane %v689, 2
        %v693 = vadd.f32 %v686, %v691
        %v695 = vrot.slane %v677, 3
        %v697 = vadd.f32 %v693, %v695
        %s698 = scalar_lea.vmem %s223, 4 [#allocation4]
        %699 = vst [vmem:[%s698] sm:$0x1] %v697
        %v700 = vrot.slane %v327, 5
        %v702 = vmul.f32 %v677, %v700
        %v703 = vrot.slane %v400, 4
        %v705 = vmul.f32 %v677, %v703
        %v707 = vrot.slane %v705, 1
        %v709 = vadd.f32 %v702, %v707
        %v710 = vrot.slane %v473, 3
        %v712 = vmul.f32 %v677, %v710
        %v714 = vrot.slane %v712, 2
        %v716 = vadd.f32 %v709, %v714
        %v717 = vadd.f32 %v716, %v695
        %718 = vst [vmem:[%s698 - $0x3] sm:$0x10] %v717
        %v719 = vmul.f32 %v678, %v679
        %v720 = vmul.f32 %v678, %v400
        %v722 = vrot.slane %v720, 1
        %v724 = vadd.f32 %v719, %v722
        %v725 = vmul.f32 %v678, %v687
        %v727 = vrot.slane %v725, 2
        %v729 = vadd.f32 %v724, %v727
        %v731 = vrot.slane %v678, 3
        %v733 = vadd.f32 %v729, %v731
        %734 = vst [vmem:[%s698 + $0x2] sm:$0x1] %v733
        %s735 = sand.u32 %s120, 1
        %s736 = sand.u32 %s120, 1
        %s737 = smul.addr %s736, 8
        %s738 = scalar_lea.vmem [#allocation4], %s737
        // Predicated region
        $region41: #{tpu_custom_call.1} parent=35 // pred_check
          %p739 = pneg %p130
        $region42: #{tpu_custom_call.1} parent=35 // pred_check_branch
          %741 = sbr.rel (%p739) target = $region44
        $region43: #{tpu_custom_call.1} parent=35 // pred_region
          %s742 = smul.addr %s18, 4
          %s743 = scalar_lea.vmem %s4, %s742
          // Predicated region
          $region45: #{tpu_custom_call.1} parent=43 // pred_check
            _
          $region46: #{tpu_custom_call.1} parent=43 // pred_check_branch
            %745 = sbr.rel (0) target = $region48
          $region47: #{tpu_custom_call.1} parent=43 // pred_region
            // Predicated region
            $region49: #{tpu_custom_call.1} parent=47 // pred_check
              _
            $region50: #{tpu_custom_call.1} parent=47 // pred_check_branch
              %747 = sbr.rel target = $region52
            $region51: #{tpu_custom_call.1} parent=47 // pred_region
              // Predicated region
              $region64: #{tpu_custom_call.1} parent=51 // pred_check
                _
              $region65: #{tpu_custom_call.1} parent=51 // pred_check_branch
                %764 = sbr.rel (0) target = $region67
              $region66: #{tpu_custom_call.1} parent=51 // pred_region
                loop: start=0, step=1, limit=1
                $region68: #{tpu_custom_call.1} parent=66 // loop_pre_header
                  _
                $region69: #{tpu_custom_call.1} parent=66 // loop_header
                  %s766 = sphi 0, %s770
                  %p767 = scmp.ge.s32.totalorder %s766, 1
                  %s771 = sphi %s738, %s738
                  %s772 = sphi %s743, %s743
                $region70: #{tpu_custom_call.1} parent=66 // loop_header_branch
                  %769 = sbr.rel (%p767) target = $region74
                $region71: #{tpu_custom_call.1} parent=66 // loop_body
                  _
                $region72: #{tpu_custom_call.1} parent=66 // loop_footer
                  %s770 = sadd.s32 1, %s766
                $region73: #{tpu_custom_call.1} parent=66 // loop_footer_branch
                  %765 = sbr.rel target = $region69
                $region74: #{tpu_custom_call.1} parent=66 // loop_exit
                  _
                loop: start=0, step=1, limit=1
                $region75: #{tpu_custom_call.1} parent=66 // loop_pre_header
                  _
                $region76: #{tpu_custom_call.1} parent=66 // loop_header
                  %s775 = sphi 0, %s779
                  %p776 = scmp.ge.s32.totalorder %s775, 1
                  %s780 = sphi %s738, %s738
                  %s781 = sphi %s743, %s743
                $region77: #{tpu_custom_call.1} parent=66 // loop_header_branch
                  %778 = sbr.rel (%p776) target = $region81
                $region78: #{tpu_custom_call.1} parent=66 // loop_body
                  %v782 = vld [vmem:[%s780] sm:$0xf]
                  %783 = vst [vmem:[%s781] sm:$0xf] %v782
                  %v784 = vld [vmem:[%s780 + $0x4] sm:$0xf]
                  %785 = vst [vmem:[%s781 + $0x8] sm:$0xf] %v784
                $region79: #{tpu_custom_call.1} parent=66 // loop_footer
                  %s779 = sadd.s32 1, %s775
                $region80: #{tpu_custom_call.1} parent=66 // loop_footer_branch
                  %774 = sbr.rel target = $region76
                $region81: #{tpu_custom_call.1} parent=66 // loop_exit
                  _
              $region67: #{tpu_custom_call.1} parent=51 // pred_fallthru
                _
            $region52: #{tpu_custom_call.1} parent=47 // pred_fallthru
              _
            // Predicated region
            $region53: #{tpu_custom_call.1} parent=47 // pred_check
              _
            $region54: #{tpu_custom_call.1} parent=47 // pred_check_branch
              %749 = sbr.rel (0) target = $region56
            $region55: #{tpu_custom_call.1} parent=47 // pred_region
              loop: start=0, step=1, limit=1
              $region57: #{tpu_custom_call.1} parent=55 // loop_pre_header
                _
              $region58: #{tpu_custom_call.1} parent=55 // loop_header
                %s752 = sphi 0, %s756
                %p753 = scmp.ge.s32.totalorder %s752, 1
                %s757 = sphi %s738, %s738
                %s758 = sphi %s743, %s743
              $region59: #{tpu_custom_call.1} parent=55 // loop_header_branch
                %755 = sbr.rel (%p753) target = $region63
              $region60: #{tpu_custom_call.1} parent=55 // loop_body
                %v759 = vld [vmem:[%s757] sm:$0xf]
                %760 = vst [vmem:[%s758] sm:$0xf] %v759
                %v761 = vld [vmem:[%s757 + $0x4] sm:$0xf]
                %762 = vst [vmem:[%s758 + $0x8] sm:$0xf] %v761
              $region61: #{tpu_custom_call.1} parent=55 // loop_footer
                %s756 = sadd.s32 1, %s752
              $region62: #{tpu_custom_call.1} parent=55 // loop_footer_branch
                %751 = sbr.rel target = $region58
              $region63: #{tpu_custom_call.1} parent=55 // loop_exit
                _
            $region56: #{tpu_custom_call.1} parent=47 // pred_fallthru
              _
          $region48: #{tpu_custom_call.1} parent=43 // pred_fallthru
            _
          %786 = vnop
        $region44: #{tpu_custom_call.1} parent=35 // pred_fallthru
          _
      $region36: #{tpu_custom_call.1} parent=5 // pred_fallthru
        _
      %p787 = scmp.le.s32.totalorder 2, %s13
      // Predicated region
      $region82: #{tpu_custom_call.1} parent=5 // pred_check
        %p788 = pneg %p787
      $region83: #{tpu_custom_call.1} parent=5 // pred_check_branch
        %790 = sbr.rel (%p788) target = $region85
      $region84: #{tpu_custom_call.1} parent=5 // pred_region
        %s791 = ssub.s32 %s13, 2
        // Predicated region
        $region86: #{tpu_custom_call.1} parent=84 // pred_check
          %p792 = pneg %p136
        $region87: #{tpu_custom_call.1} parent=84 // pred_check_branch
          %794 = sbr.rel (%p792) target = $region89
        $region88: #{tpu_custom_call.1} parent=84 // pred_region
          %s795 = sand.u32 %s121, 1
          %s796 = sand.u32 %s121, 1
          %s797 = smul.addr %s796, 8
          %s798 = scalar_lea.vmem [#allocation4], %s797
        $region89: #{tpu_custom_call.1} parent=84 // pred_fallthru
          _
      $region85: #{tpu_custom_call.1} parent=5 // pred_fallthru
        _
    $region6: #{tpu_custom_call.1} parent=1 // loop_footer
      %s17 = sadd.s32 1, %s13
    $region7: #{tpu_custom_call.1} parent=1 // loop_footer_branch
      %12 = sbr.rel target = $region3
    $region8: #{tpu_custom_call.1} parent=1 // loop_exit
      _
    %799 = vsyncpa [#allocation3], 1
    %s800 = scalar_lea.sflag [#allocation3], 1
    %801 = vsyncpa %s800, 1

</llo_original>
